<compile_context>
chip_gen: v5e
topology: v5e:2x2
jax: 0.10.0
libtpu: 0.0.40
codegen_flags: <defaults>
</compile_context>

<pallas_src>
import functools
import math

import jax
import jax.numpy as jnp
from jax import lax
from jax.experimental import pallas as pl
from jax.experimental.pallas import tpu as pltpu

BN_EPS = 1e-5
_MIB = 1024 * 1024


# --------------------------------------------------------------------------- kernels
def _linear_act(x, w_tile):
    # x:(N, I) contracted with w_tile:(T, I) on the shared I axis -> (N, T), f32 acc.
    return lax.dot_general(x, w_tile, (((1,), (1,)), ((), ())),
                           preferred_element_type=jnp.float32)


def _bn_relu(y, gamma, beta):
    """Train-mode BatchNorm1d (biased batch variance) + affine + ReLU over y:(N, T) f32.

    One stats pass (sum, sum-of-squares) + one fused normalize/affine/ReLU pass; the
    centered `diff` temp is never materialized. If reused where |mean| >> std, switch
    to a shifted / two-pass variance (cancellation caveat).
    """
    inv_n = 1.0 / y.shape[0]
    s1 = jnp.sum(y, axis=0, keepdims=True)
    s2 = jnp.sum(y * y, axis=0, keepdims=True)
    mean = s1 * inv_n
    var = jnp.maximum(s2 * inv_n - mean * mean, 0.0)
    scale = gamma.astype(jnp.float32) * lax.rsqrt(var + BN_EPS)
    shift = beta.astype(jnp.float32) - mean * scale
    return jnp.maximum(y * scale + shift, 0.0)


def _single_block_kernel(x_ref, w_ref, gamma_ref, beta_ref, out_ref, *, n_out):
    """Whole problem resident in one grid step: out = [relu(bn(x @ w^T)) | x]."""
    x = x_ref[...]
    act = _bn_relu(_linear_act(x, w_ref[...]), gamma_ref[...], beta_ref[...])
    out_ref[:, :n_out] = act.astype(out_ref.dtype)
    out_ref[:, n_out:] = x.astype(out_ref.dtype)


def _tiled_kernel(x_ref, w_ref, gamma_ref, beta_ref, out_ref, *,
                  n_act_tiles, tile, fuse_passthrough):
    """Column-tiled: steps j < n_act_tiles emit activation tiles; later steps (fused
    mode only) copy the VMEM-resident x straight into the tail of the concat output."""
    if not fuse_passthrough:
        y = _linear_act(x_ref[...], w_ref[...])
        out_ref[...] = _bn_relu(y, gamma_ref[...], beta_ref[...]).astype(out_ref.dtype)
        return

    j = pl.program_id(0)

    @pl.when(j < n_act_tiles)
    def _act_tile():
        y = _linear_act(x_ref[...], w_ref[...])
        out_ref[...] = _bn_relu(y, gamma_ref[...], beta_ref[...]).astype(out_ref.dtype)

    @pl.when(j >= n_act_tiles)
    def _passthrough_tile():
        col = pl.multiple_of((j - n_act_tiles) * tile, tile)
        out_ref[...] = x_ref[:, pl.ds(col, tile)].astype(out_ref.dtype)


# ------------------------------------------------------------------ VMEM planning
def _vmem_budget_and_limit():
    """Per-core tile-plan budget and Mosaic scoped-VMEM limit for this generation."""
    try:
        cap = int(pltpu.get_tpu_info().vmem_capacity_bytes)
    except Exception:
        cap = 64 * _MIB  # conservative: v7x has 64 MiB VMEM per TensorCore
    # ~48 MiB plan / 56 MiB limit on v7x; ~96 MiB plan / 120 MiB limit on v5e/v6e.
    return (3 * cap) // 4, cap - 8 * _MIB


def _tiled_plan_bytes(n, i, tile, itemsize):
    resident_x = n * i * itemsize                    # single-buffered (pl.Buffered(1))
    per_tile = tile * (2 * i * itemsize              # w tile, double-buffered
                       + 2 * n * itemsize            # out tile, double-buffered
                       + 4 * itemsize                # gamma/beta tiles (2 bufs each)
                       + 8 * n)                      # f32 y + fused-epilogue temp
    return resident_x + per_tile


def _single_plan_bytes(n, i, o, itemsize):
    return (n * i + o * i + 2 * o + n * (o + i)) * itemsize + 8 * n * o


def _plan(n, i, o, itemsize, budget):
    """Choose ('fused_tiled', T) / ('single', None) / ('act_tiled', T)."""
    if n * i * itemsize > budget:
        # TODO(synk): large-batch two-pass scheme (grid = (O-tiles 'parallel',
        # N-tiles 'arbitrary'), per-feature sum/sumsq VMEM scratch, second normalize
        # sweep) once the whole batch no longer fits resident in VMEM.
        raise NotImplementedError("batch does not fit resident in VMEM")

    # Preferred: fused concat; column tile = largest 128-multiple dividing both O and I
    # (always yields >= 2 'parallel' tiles, so both v7x TensorCores stay busy).
    g = math.gcd(o, i)
    t = (g // 128) * 128
    while t >= 128:
        if g % t == 0 and _tiled_plan_bytes(n, i, t, itemsize) <= budget:
            return "fused_tiled", t
        t -= 128
    # Small / unaligned problems: keep everything resident, one grid step.
    if _single_plan_bytes(n, i, o, itemsize) <= budget:
        return "single", None
    # Fallback: tile the activation only, concat in the wrapper.
    if o % 128 == 0:
        t = ((o // 2 if o >= 256 else o) // 128) * 128   # >= 2 tiles when o >= 256
        while t >= 128:
            if o % t == 0 and _tiled_plan_bytes(n, i, t, itemsize) <= budget:
                return "act_tiled", t
            t -= 128
    elif _tiled_plan_bytes(n, i, o, itemsize) <= budget:
        return "act_tiled", o
    raise NotImplementedError("no tiling plan fits the VMEM budget")


# ------------------------------------------------------------------------ wrapper
@functools.partial(jax.jit, static_argnames=("compute_dtype",))
def residual_forward(x, w, b, gamma, beta, *, compute_dtype=None):
    """x:(N,I); w:(O,I); b,gamma,beta:(O,). Returns concat([relu(bn(x@w^T+b)), x], 1).

    `b` is accepted for nn.Linear parity but never reaches the kernel: under
    train-mode BatchNorm the bias cancels exactly after batch-mean subtraction.
    (If eval-mode running stats were ever used, the bias must be re-introduced.)
    `compute_dtype=jnp.bfloat16` optionally feeds the MXU bf16 inputs (f32 accumulate).
    """
    del b
    n, i = x.shape
    o = w.shape[0]
    out_dtype = x.dtype

    if compute_dtype is not None:
        x = x.astype(compute_dtype)   # note: passthrough columns then also round-trip
        w = w.astype(compute_dtype)   # through compute_dtype.
    itemsize = x.dtype.itemsize

    g2 = gamma.reshape(1, o)
    b2 = beta.reshape(1, o)

    budget, vmem_limit = _vmem_budget_and_limit()
    mode, t = _plan(n, i, o, itemsize, budget)

    if mode == "single":
        kernel = functools.partial(_single_block_kernel, n_out=o)
        return pl.pallas_call(
            kernel,
            out_shape=jax.ShapeDtypeStruct((n, o + i), out_dtype),
            grid=(1,),
            in_specs=[
                pl.BlockSpec((n, i), lambda j: (0, 0)),
                pl.BlockSpec((o, i), lambda j: (0, 0)),
                pl.BlockSpec((1, o), lambda j: (0, 0)),
                pl.BlockSpec((1, o), lambda j: (0, 0)),
            ],
            out_specs=pl.BlockSpec((n, o + i), lambda j: (0, 0)),
            compiler_params=pltpu.CompilerParams(
                dimension_semantics=("arbitrary",),
                vmem_limit_bytes=vmem_limit,
            ),
        )(x, w, g2, b2)

    if mode == "fused_tiled":
        n_act = o // t
        kernel = functools.partial(_tiled_kernel, n_act_tiles=n_act, tile=t,
                                   fuse_passthrough=True)
        w_idx = lambda j: (jnp.minimum(j, n_act - 1), 0)   # x-copy steps reuse the last
        p_idx = lambda j: (0, jnp.minimum(j, n_act - 1))   # act tile -> no extra DMA
        return pl.pallas_call(
            kernel,
            out_shape=jax.ShapeDtypeStruct((n, o + i), out_dtype),
            grid=((o + i) // t,),
            in_specs=[
                # x's block never changes -> single-buffer it, saving N*I bytes of VMEM.
                pl.BlockSpec((n, i), lambda j: (0, 0), pipeline_mode=pl.Buffered(1)),
                pl.BlockSpec((t, i), w_idx),               # contiguous row tiles of w
                pl.BlockSpec((1, t), p_idx),
                pl.BlockSpec((1, t), p_idx),
            ],
            out_specs=pl.BlockSpec((n, t), lambda j: (0, j)),   # lane-dense (t%128==0)
            compiler_params=pltpu.CompilerParams(
                dimension_semantics=("parallel",),
                vmem_limit_bytes=vmem_limit,
            ),
        )(x, w, g2, b2)

    # mode == "act_tiled": used only when the concatenated layout cannot be tiled
    # lane-aligned and the whole problem does not fit in a single resident block.
    n_act = o // t
    kernel = functools.partial(_tiled_kernel, n_act_tiles=n_act, tile=t,
                               fuse_passthrough=False)
    act = pl.pallas_call(
        kernel,
        out_shape=jax.ShapeDtypeStruct((n, o), out_dtype),
        grid=(n_act,),
        in_specs=[
            pl.BlockSpec((n, i), lambda j: (0, 0), pipeline_mode=pl.Buffered(1)),
            pl.BlockSpec((t, i), lambda j: (j, 0)),
            pl.BlockSpec((1, t), lambda j: (0, j)),
            pl.BlockSpec((1, t), lambda j: (0, j)),
        ],
        out_specs=pl.BlockSpec((n, t), lambda j: (0, j)),
        compiler_params=pltpu.CompilerParams(
            dimension_semantics=("parallel",),
            vmem_limit_bytes=vmem_limit,
        ),
    )(x, w, g2, b2)
    # TODO(synk): fold this concat into the kernel too for unaligned O (needs masked
    # tail handling for the x block).
    return jnp.concatenate([act, x.astype(out_dtype)], axis=1)


# ---------------------------------------------------------------------- reference
def residual_ref(x, w, b, gamma, beta):
    """Pure-JAX reference of the torch forward (BatchNorm1d training mode, bias kept)."""
    y = x @ w.T + b
    mean = jnp.mean(y, axis=0, keepdims=True)
    var = jnp.mean((y - mean) ** 2, axis=0, keepdims=True)   # biased, like torch BN
    act = jnp.maximum((y - mean) / jnp.sqrt(var + BN_EPS) * gamma + beta, 0.0)
    return jnp.concatenate([act, x], axis=1)


if __name__ == "__main__":
    def make_case(key, n, i, o):
        kx, kw, kb, kg, ke = jax.random.split(key, 5)
        bound = 1.0 / (i ** 0.5)
        x = jax.random.normal(kx, (n, i), dtype=jnp.float32)
        w = jax.random.uniform(kw, (o, i), minval=-bound, maxval=bound, dtype=jnp.float32)
        b = jax.random.uniform(kb, (o,), minval=-bound, maxval=bound, dtype=jnp.float32)
        gamma = 1.0 + 0.1 * jax.random.normal(kg, (o,), dtype=jnp.float32)
        beta = 0.1 * jax.random.normal(ke, (o,), dtype=jnp.float32)
        return x, w, b, gamma, beta

    k1, k2 = jax.random.split(jax.random.PRNGKey(0))

    # 1) Module-sized case (batch=8, in=out=32): exercises the single-resident-block path.
    args = make_case(k1, 8, 32, 32)
    out = jax.block_until_ready(residual_forward(*args))
    ref = residual_ref(*args)
    assert out.shape == (8, 64)
    assert jnp.allclose(out, ref, atol=2e-4, rtol=2e-4), "single-block path mismatch"

    # 2) Lane-aligned case (batch=16, in=128, out=256): exercises the column-tiled path
    #    with the fused passthrough (grid=3: 2 activation tiles + 1 x-copy tile).
    args = make_case(k2, 16, 128, 256)
    out = jax.block_until_ready(residual_forward(*args))
    ref = residual_ref(*args)
    assert out.shape == (16, 384)
    assert jnp.allclose(out, ref, atol=2e-4, rtol=2e-4), "tiled path mismatch"

    print("KERNEL_OK")
</pallas_src>

<mosaic_0001>
module attributes {stable_mosaic.version = 11 : i64} {
  func.func @_single_block_kernel(%arg0: i32, %arg1: memref<8x32xf32, #tpu.memory_space<vmem>>, %arg2: memref<32x32xf32, #tpu.memory_space<vmem>>, %arg3: memref<1x32xf32, #tpu.memory_space<vmem>>, %arg4: memref<1x32xf32, #tpu.memory_space<vmem>>, %arg5: memref<8x64xf32, #tpu.memory_space<vmem>>) attributes {dimension_semantics = [#tpu.dimension_semantics<arbitrary>], iteration_bounds = array<i64: 1>, scalar_prefetch = 0 : i64, scratch_operands = 0 : i64, tpu.core_type = #tpu.core_type<tc>, window_params = [{pipeline_mode = #tpu.pipeline_mode<synchronous>, transform_indices = @transform_0, window_bounds = array<i64: 8, 32>}, {pipeline_mode = #tpu.pipeline_mode<synchronous>, transform_indices = @transform_1, window_bounds = array<i64: 32, 32>}, {pipeline_mode = #tpu.pipeline_mode<synchronous>, transform_indices = @transform_2, window_bounds = array<i64: 1, 32>}, {pipeline_mode = #tpu.pipeline_mode<synchronous>, transform_indices = @transform_3, window_bounds = array<i64: 1, 32>}, {pipeline_mode = #tpu.pipeline_mode<synchronous>, transform_indices = @transform_4, window_bounds = array<i64: 8, 64>}]} {
    %c0 = arith.constant 0 : index
    %c0_0 = arith.constant 0 : index
    %0 = vector.load %arg1[%c0, %c0_0] : memref<8x32xf32, #tpu.memory_space<vmem>>, vector<8x32xf32>
    %c0_1 = arith.constant 0 : index
    %c0_2 = arith.constant 0 : index
    %1 = vector.load %arg2[%c0_1, %c0_2] : memref<32x32xf32, #tpu.memory_space<vmem>>, vector<32x32xf32>
    %cst = arith.constant dense<0.000000e+00> : vector<8x32xf32>
    %2 = tpu.matmul %0, %1, %cst {dimension_numbers = #tpu.dot_dimension_numbers<[1], [1], [0], [0], [0, 0, 1, 0], [], []>} : vector<8x32xf32>, vector<32x32xf32>, vector<8x32xf32> -> vector<8x32xf32>
    %c0_3 = arith.constant 0 : index
    %c0_4 = arith.constant 0 : index
    %3 = vector.load %arg3[%c0_3, %c0_4] : memref<1x32xf32, #tpu.memory_space<vmem>>, vector<1x32xf32>
    %c0_5 = arith.constant 0 : index
    %c0_6 = arith.constant 0 : index
    %4 = vector.load %arg4[%c0_5, %c0_6] : memref<1x32xf32, #tpu.memory_space<vmem>>, vector<1x32xf32>
    %cst_7 = arith.constant dense<0.000000e+00> : vector<32xf32>
    %5 = vector.multi_reduction <add>, %2, %cst_7 [0] : vector<8x32xf32> to vector<32xf32>
    %6 = vector.shape_cast %5 : vector<32xf32> to vector<1x32xf32>
    %7 = arith.mulf %2, %2 : vector<8x32xf32>
    %cst_8 = arith.constant dense<0.000000e+00> : vector<32xf32>
    %8 = vector.multi_reduction <add>, %7, %cst_8 [0] : vector<8x32xf32> to vector<32xf32>
    %9 = vector.shape_cast %8 : vector<32xf32> to vector<1x32xf32>
    %cst_9 = arith.constant 1.250000e-01 : f32
    %10 = vector.broadcast %cst_9 : f32 to vector<1x32xf32>
    %11 = arith.mulf %6, %10 : vector<1x32xf32>
    %cst_10 = arith.constant 1.250000e-01 : f32
    %12 = vector.broadcast %cst_10 : f32 to vector<1x32xf32>
    %13 = arith.mulf %9, %12 : vector<1x32xf32>
    %14 = arith.mulf %11, %11 : vector<1x32xf32>
    %15 = arith.subf %13, %14 : vector<1x32xf32>
    %cst_11 = arith.constant 0.000000e+00 : f32
    %16 = vector.broadcast %cst_11 : f32 to vector<1x32xf32>
    %17 = arith.maximumf %15, %16 : vector<1x32xf32>
    %cst_12 = arith.constant 9.99999974E-6 : f32
    %18 = vector.broadcast %cst_12 : f32 to vector<1x32xf32>
    %19 = arith.addf %17, %18 : vector<1x32xf32>
    %20 = math.rsqrt %19 : vector<1x32xf32>
    %21 = arith.mulf %3, %20 : vector<1x32xf32>
    %22 = arith.mulf %11, %21 : vector<1x32xf32>
    %23 = arith.subf %4, %22 : vector<1x32xf32>
    %24 = vector.broadcast %21 : vector<1x32xf32> to vector<8x32xf32>
    %25 = arith.mulf %2, %24 : vector<8x32xf32>
    %26 = vector.broadcast %23 : vector<1x32xf32> to vector<8x32xf32>
    %27 = arith.addf %25, %26 : vector<8x32xf32>
    %cst_13 = arith.constant 0.000000e+00 : f32
    %28 = vector.broadcast %cst_13 : f32 to vector<8x32xf32>
    %29 = arith.maximumf %27, %28 : vector<8x32xf32>
    %c0_14 = arith.constant 0 : index
    %c0_15 = arith.constant 0 : index
    %30 = vector.load %arg5[%c0_14, %c0_15] : memref<8x64xf32, #tpu.memory_space<vmem>>, vector<8x32xf32>
    tpu.vector_store %arg5[%c0_14, %c0_15], %29 {strides = array<i32>} : memref<8x64xf32, #tpu.memory_space<vmem>>, vector<8x32xf32>,
    %c0_16 = arith.constant 0 : index
    %c32 = arith.constant 32 : index
    %31 = vector.load %arg5[%c0_16, %c32] : memref<8x64xf32, #tpu.memory_space<vmem>>, vector<8x32xf32>
    tpu.vector_store %arg5[%c0_16, %c32], %0 {strides = array<i32>} : memref<8x64xf32, #tpu.memory_space<vmem>>, vector<8x32xf32>,
    return
  }
  func.func @transform_0(%arg0: i32) -> (i32, i32) {
    %c0_i32 = arith.constant 0 : i32
    %c0_i32_0 = arith.constant 0 : i32
    %c0_i32_1 = arith.constant 0 : i32
    return %c0_i32, %c0_i32_0 : i32, i32
  }
  func.func @transform_1(%arg0: i32) -> (i32, i32) {
    %c0_i32 = arith.constant 0 : i32
    %c0_i32_0 = arith.constant 0 : i32
    %c0_i32_1 = arith.constant 0 : i32
    return %c0_i32, %c0_i32_0 : i32, i32
  }
  func.func @transform_2(%arg0: i32) -> (i32, i32) {
    %c0_i32 = arith.constant 0 : i32
    %c0_i32_0 = arith.constant 0 : i32
    %c0_i32_1 = arith.constant 0 : i32
    return %c0_i32, %c0_i32_0 : i32, i32
  }
  func.func @transform_3(%arg0: i32) -> (i32, i32) {
    %c0_i32 = arith.constant 0 : i32
    %c0_i32_0 = arith.constant 0 : i32
    %c0_i32_1 = arith.constant 0 : i32
    return %c0_i32, %c0_i32_0 : i32, i32
  }
  func.func @transform_4(%arg0: i32) -> (i32, i32) {
    %c0_i32 = arith.constant 0 : i32
    %c0_i32_0 = arith.constant 0 : i32
    %c0_i32_1 = arith.constant 0 : i32
    return %c0_i32, %c0_i32_0 : i32, i32
  }
}

</mosaic_0001>

<llo_original>
// kernel: residual_forward.1
$region0: #{residual_forward.1}
  #allocation0 [shape = 'u32[]', space=smem, size = 0x4, offset = 0x4, fixed_abs, tag = 'smem constant byte address 0x4 - core index']
  #allocation1 [shape = 'u32[72,128]{1,0:T(1,128)}', space=vmem, size = 0x9000, scoped, tag = 'internal scratch']
  %s0 = inlined_call_operand.hbm [shape: f32[8,32], index: 0, kind: input, shape index: {}]
  %s1 = inlined_call_operand.hbm [shape: f32[32,32], index: 1, kind: input, shape index: {}]
  %s2 = inlined_call_operand.vmem [shape: f32[1,32], index: 2, kind: input, shape index: {}]
  %s3 = inlined_call_operand.vmem [shape: f32[1,32], index: 3, kind: input, shape index: {}]
  %s4 = inlined_call_operand.hbm [shape: f32[8,64], index: 4, kind: output, shape index: {}]
  %s5 = sld [smem:[#allocation0]]
  $region34: #{residual_forward.1} parent=0
    _
  %s7 = ssub.s32 1, %s5
  %s8 = scalar_select 0, %s7, %s5
  $region1: #{residual_forward.1} parent=0
    #allocation2 [shape = 'u8[4096]{0}', space=vmem, size = 0x1000, scoped, tag = 'input window, operand 0, single buffered']
    #allocation3 [shape = 's32[1]{0}', space=sflag, size = 0x4, scoped, tag = 'scoped memory for residual_forward.1']
    #allocation4 [shape = 's32[1]{0}', space=sflag, size = 0x4, scoped, tag = 'scoped memory for residual_forward.1']
    #allocation5 [shape = 'u8[16384]{0}', space=vmem, size = 0x4000, scoped, tag = 'input window, operand 1, single buffered']
    #allocation6 [shape = 's32[1]{0}', space=sflag, size = 0x4, scoped, tag = 'scoped memory for residual_forward.1']
    #allocation7 [shape = 'u8[4096]{0}', space=vmem, size = 0x1000, scoped, tag = 'output window, operand 0, single buffered']
    %9 = vsyncpa [#allocation3], 0
    %10 = vsyncpa [#allocation6], 0
    %11 = vsyncpa [#allocation4], 0
    // Predicated region
    $region2: #{residual_forward.1} parent=1 // pred_check
      _
    $region3: #{residual_forward.1} parent=1 // pred_check_branch
      %13 = sbr.rel (0) target = $region5
    $region4: #{residual_forward.1} parent=1 // pred_region
      %15 = vsyncadd [#allocation3], 0
      %s17 = sshll.u32 %s0, 4
      %s18 = int_to_ptr.hbm [resolvable:$true] %s17
      %s19 = sshll.u32 [#allocation2], 4
      %s20 = int_to_ptr.vmem [resolvable:$true] %s19
      %22 = dma.hbm_to_vmem [thread:$0]  %s18, 128, %s20, [#allocation3]
    $region5: #{residual_forward.1} parent=1 // pred_fallthru
      _
    // Predicated region
    $region6: #{residual_forward.1} parent=1 // pred_check
      _
    $region7: #{residual_forward.1} parent=1 // pred_check_branch
      %24 = sbr.rel (0) target = $region9
    $region8: #{residual_forward.1} parent=1 // pred_region
      %26 = vsyncadd [#allocation6], 0
      %s27 = sshll.u32 %s1, 4
      %s28 = int_to_ptr.hbm [resolvable:$true] %s27
      %s29 = sshll.u32 [#allocation5], 4
      %s30 = int_to_ptr.vmem [resolvable:$true] %s29
      %35 = dma.hbm_to_vmem [thread:$0]  %s28, 512, %s30, [#allocation6], 128, 128, 8
    $region9: #{residual_forward.1} parent=1 // pred_fallthru
      _
    // Predicated region
    $region10: #{residual_forward.1} parent=1 // pred_check
      _
    $region11: #{residual_forward.1} parent=1 // pred_check_branch
      %37 = sbr.rel (0) target = $region13
    $region12: #{residual_forward.1} parent=1 // pred_region
      _
    $region13: #{residual_forward.1} parent=1 // pred_fallthru
      _
    // Predicated region
    $region14: #{residual_forward.1} parent=1 // pred_check
      _
    $region15: #{residual_forward.1} parent=1 // pred_check_branch
      %39 = sbr.rel (0) target = $region17
    $region16: #{residual_forward.1} parent=1 // pred_region
      _
    $region17: #{residual_forward.1} parent=1 // pred_fallthru
      _
    // Predicated region
    $region18: #{residual_forward.1} parent=1 // pred_check
      _
    $region19: #{residual_forward.1} parent=1 // pred_check_branch
      %41 = sbr.rel (0) target = $region21
    $region20: #{residual_forward.1} parent=1 // pred_region
      %43 = dma.done [#allocation3], 128
    $region21: #{residual_forward.1} parent=1 // pred_fallthru
      _
    // Predicated region
    $region22: #{residual_forward.1} parent=1 // pred_check
      _
    $region23: #{residual_forward.1} parent=1 // pred_check_branch
      %45 = sbr.rel (0) target = $region25
    $region24: #{residual_forward.1} parent=1 // pred_region
      %47 = dma.done [#allocation6], 512
    $region25: #{residual_forward.1} parent=1 // pred_fallthru
      _
    %v48 = vld [vmem:[#allocation2] sm:$0xff]
    %v49 = vld [vmem:[#allocation5] sm:$0xff]
    %v50 = vld [vmem:[#allocation5 + $0x8] sm:$0xff]
    %v51 = vld [vmem:[#allocation5 + $0x10] sm:$0xff]
    %v52 = vld [vmem:[#allocation5 + $0x18] sm:$0xff]
    %vm53 = vcmask 261120
    %v55 = vsel %vm53, %v48, 0
    %v58 = vsel %vm53, %v49, 0
    %v61 = vsel %vm53, %v50, 0
    %v64 = vsel %vm53, %v51, 0
    %v67 = vsel %vm53, %v52, 0
    %69 = vmatpush.xpose.msra.mxu0 0.0
    %70 = vmatpush.xpose.msra.mxu0 0.0
    %71 = vmatpush.xpose.msra.mxu0 0.0
    %72 = vmatpush.xpose.msra.mxu0 0.0
    %73 = vmatpush.xpose.msra.mxu0 0.0
    %74 = vmatpush.xpose.msra.mxu0 0.0
    %75 = vmatpush.xpose.msra.mxu0 0.0
    %76 = vmatpush.xpose.msra.mxu0 0.0
    %77 = vmatpush.xpose.msra.mxu0 0.0
    %78 = vmatpush.xpose.msra.mxu0 0.0
    %79 = vmatpush.xpose.msra.mxu0 0.0
    %80 = vmatpush.xpose.msra.mxu0 0.0
    %81 = vmatpush.xpose.msra.mxu0 %v67
    %82 = vmatpush.xpose.msra.mxu0 %v64
    %83 = vmatpush.xpose.msra.mxu0 %v61
    %84 = vmatpush.xpose.msra.mxu0 %v58
    %85 = vmatmul.f32.gmra.mxu0 %v55
    %v86 = vpop.f32.mrf.mxu0
    %v87 = vadd.f32 0.0, %v86
    %88 = vdwg.mxu0
    %v89 = vld [vmem:[%s2] sm:$0x1]
    %v90 = vld [vmem:[%s3] sm:$0x1]
    %v91 = vsel %vm53, %v87, 0.0
    %v92 = vrot.slane %v91, 4
    %v93 = vadd.f32 %v91, %v92
    %v94 = vrot.slane %v93, 2
    %v95 = vadd.f32 %v93, %v94
    %v96 = vrot.slane %v95, 1
    %v97 = vadd.f32 %v95, %v96
    %v98 = vmul.f32 %v87, %v87
    %v99 = vsel %vm53, %v98, 0.0
    %v100 = vrot.slane %v99, 4
    %v101 = vadd.f32 %v99, %v100
    %v102 = vrot.slane %v101, 2
    %v103 = vadd.f32 %v101, %v102
    %v104 = vrot.slane %v103, 1
    %v105 = vadd.f32 %v103, %v104
    %v106 = vmul.f32 %v97, 0.125
    %v107 = vmul.f32 %v105, 0.125
    %v108 = vmul.f32 %v106, %v106
    %v109 = vsub.f32 %v107, %v108
    %v110 = vmax.f32 %v109, 0.0
    %v111 = vadd.f32 %v110, 1e-05
    %v112 = vrsqrt.pop %v111
    %v113 = vmul.f32 %v112, %v111
    %v114 = vmul.f32 %v113, %v112
    %v115 = vmul.f32 0.5, %v114
    %v116 = vsub.f32 1.5, %v115
    %v117 = vmul.f32 %v112, %v116
    %vm118 = vweird.f32 %v111
    %vm119 = vweird.f32 %v112
    %vm120 = vmor %vm118, %vm119
    %v121 = vsel %vm120, %v112, %v117
    %v122 = vmul.f32 %v89, %v121
    %v123 = vmul.f32 %v106, %v122
    %v124 = vsub.f32 %v90, %v123
    %v126 = vperm.slane %v122, 0
    %v128 = vmul.f32 %v87, %v126
    %v130 = vperm.slane %v124, 0
    %v132 = vadd.f32 %v128, %v130
    %v133 = vmax.f32 %v132, 0.0
    %134 = vst.msk [vmem:[#allocation7] sm:$0xff] %vm53, %v133
    %135 = vrot.lane.b32.xlu0 %v48, 32
    %v136 = vpop.permute.xlu0 %135
    %vm138 = vcmask 523520
    %139 = vst.msk [vmem:[#allocation7] sm:$0xff] %vm138, %v136
    // Predicated region
    $region26: #{residual_forward.1} parent=1 // pred_check
      _
    $region27: #{residual_forward.1} parent=1 // pred_check_branch
      %141 = sbr.rel (0) target = $region29
    $region28: #{residual_forward.1} parent=1 // pred_region
      %143 = vsyncadd [#allocation4], 0
      %s145 = sshll.u32 [#allocation7], 4
      %s146 = int_to_ptr.vmem [resolvable:$true] %s145
      %s147 = sshll.u32 %s4, 4
      %s148 = int_to_ptr.hbm [resolvable:$true] %s147
      %150 = dma.vmem_to_hbm [thread:$0]  %s146, 128, %s148, [#allocation4]
    $region29: #{residual_forward.1} parent=1 // pred_fallthru
      _
    // Predicated region
    $region30: #{residual_forward.1} parent=1 // pred_check
      _
    $region31: #{residual_forward.1} parent=1 // pred_check_branch
      %152 = sbr.rel (0) target = $region33
    $region32: #{residual_forward.1} parent=1 // pred_region
      %154 = dma.done [#allocation4], 128
    $region33: #{residual_forward.1} parent=1 // pred_fallthru
      _
    %155 = vsyncpa [#allocation3], 1
    %156 = vsyncpa [#allocation6], 1
    %157 = vsyncpa [#allocation4], 1

</llo_original>
